<compile_context>
chip_gen: v6e
topology: v6e:2x2x1
jax: 0.10.0
libtpu: 0.0.40
codegen_flags: <defaults>
</compile_context>

<pallas_src>
import math
import jax
import jax.numpy as jnp
from jax import lax
from jax.experimental import pallas as pl
from jax.experimental.pallas import tpu as pltpu

VMEM_LIMIT = 64 * 1024 * 1024  # explicit scoped-VMEM budget


# ---------------------------------------------------------------------------
# Tiling helper
# ---------------------------------------------------------------------------

def _pick_tile(dim, candidates):
    """Largest candidate that evenly divides `dim`, else the full dim."""
    for c in candidates:
        if dim % c == 0:
            return c
    return dim


# ---------------------------------------------------------------------------
# Kernel 1: general matmul + bias  (K-tiled, f32 accumulator scratch)
# ---------------------------------------------------------------------------

def _matmul_bias_kernel(x_ref, w_ref, b_ref, o_ref, acc_ref):
    @pl.when(pl.program_id(2) == 0)
    def _():
        acc_ref[...] = jnp.zeros_like(acc_ref)

    acc_ref[...] += jnp.dot(x_ref[...], w_ref[...],
                            preferred_element_type=jnp.float32)

    @pl.when(pl.program_id(2) == pl.num_programs(2) - 1)
    def _():
        o_ref[...] = (acc_ref[...] + b_ref[...]).astype(o_ref.dtype)


def pallas_matmul_bias(x2d, w, b, out_dtype=jnp.bfloat16):
    # x2d: bf16 [M,K], w: bf16 [K,N], b: f32 [N]
    M, K = x2d.shape
    N = w.shape[1]
    tm = _pick_tile(M, (512, 256, 128, 64, 32, 16, 8))
    tn = _pick_tile(N, (512, 256, 128))
    tk = _pick_tile(K, (512, 256))           # capped at 512 (v5e VMEM headroom)
    return pl.pallas_call(
        _matmul_bias_kernel,
        out_shape=jax.ShapeDtypeStruct((M, N), out_dtype),
        grid=(M // tm, N // tn, K // tk),
        in_specs=[pl.BlockSpec((tm, tk), lambda i, j, k: (i, k)),
                  pl.BlockSpec((tk, tn), lambda i, j, k: (k, j)),
                  pl.BlockSpec((1, tn), lambda i, j, k: (0, j))],
        out_specs=pl.BlockSpec((tm, tn), lambda i, j, k: (i, j)),
        scratch_shapes=[pltpu.VMEM((tm, tn), jnp.float32)],
        compiler_params=pltpu.CompilerParams(
            dimension_semantics=("parallel", "parallel", "arbitrary"),
            vmem_limit_bytes=VMEM_LIMIT),
    )(x2d, w, b.reshape(1, N))


# ---------------------------------------------------------------------------
# Kernel 2: output projection + residual add + LayerNorm (fused epilogue)
# ---------------------------------------------------------------------------

def _out_add_ln_kernel(a_ref, r_ref, w_ref, b_ref, g_ref, bt_ref, o_ref):
    h = jnp.dot(a_ref[...], w_ref[...],
                preferred_element_type=jnp.float32) + b_ref[...]
    z = r_ref[...].astype(jnp.float32) + h                 # residual add (f32)
    mu = jnp.mean(z, axis=-1, keepdims=True)
    var = jnp.mean((z - mu) ** 2, axis=-1, keepdims=True)  # biased var (PyTorch)
    zn = (z - mu) * lax.rsqrt(var + 1e-5)
    o_ref[...] = (zn * g_ref[...] + bt_ref[...]).astype(o_ref.dtype)


def pallas_out_add_ln(a2d, res2d, w, b, gamma, beta):
    M, D = a2d.shape
    N = w.shape[1]
    tm = _pick_tile(M, (512, 256, 128, 64, 32, 16, 8))
    return pl.pallas_call(
        _out_add_ln_kernel,
        out_shape=jax.ShapeDtypeStruct((M, N), jnp.bfloat16),
        grid=(M // tm,),
        in_specs=[pl.BlockSpec((tm, D), lambda i: (i, 0)),
                  pl.BlockSpec((tm, N), lambda i: (i, 0)),
                  pl.BlockSpec((D, N), lambda i: (0, 0)),
                  pl.BlockSpec((1, N), lambda i: (0, 0)),
                  pl.BlockSpec((1, N), lambda i: (0, 0)),
                  pl.BlockSpec((1, N), lambda i: (0, 0))],
        out_specs=pl.BlockSpec((tm, N), lambda i: (i, 0)),
        compiler_params=pltpu.CompilerParams(
            dimension_semantics=("parallel",),
            vmem_limit_bytes=VMEM_LIMIT),
    )(a2d, res2d, w, b.reshape(1, N), gamma.reshape(1, N), beta.reshape(1, N))


# ---------------------------------------------------------------------------
# Kernel 3: FFN (fc2(relu(fc1(x)))) + residual add + LayerNorm (fused)
# ---------------------------------------------------------------------------

def _ffn_add_ln_kernel(x_ref, w1_ref, b1_ref, w2_ref, b2_ref, g_ref, bt_ref, o_ref):
    x = x_ref[...]                                         # bf16
    h = jnp.dot(x, w1_ref[...],
                preferred_element_type=jnp.float32) + b1_ref[...]
    h = jnp.maximum(h, 0.0).astype(jnp.bfloat16)
    y = jnp.dot(h, w2_ref[...],
                preferred_element_type=jnp.float32) + b2_ref[...]
    z = x.astype(jnp.float32) + y                          # residual add (f32)
    mu = jnp.mean(z, axis=-1, keepdims=True)
    var = jnp.mean((z - mu) ** 2, axis=-1, keepdims=True)
    zn = (z - mu) * lax.rsqrt(var + 1e-5)
    o_ref[...] = (zn * g_ref[...] + bt_ref[...]).astype(o_ref.dtype)


def pallas_ffn_add_ln(x2d, w1, b1, w2, b2, gamma, beta):
    M, D = x2d.shape
    F = w1.shape[1]
    tm = _pick_tile(M, (512, 256, 128, 64, 32, 16, 8))
    return pl.pallas_call(
        _ffn_add_ln_kernel,
        out_shape=jax.ShapeDtypeStruct((M, D), jnp.bfloat16),
        grid=(M // tm,),
        in_specs=[pl.BlockSpec((tm, D), lambda i: (i, 0)),
                  pl.BlockSpec((D, F), lambda i: (0, 0)),
                  pl.BlockSpec((1, F), lambda i: (0, 0)),
                  pl.BlockSpec((F, D), lambda i: (0, 0)),
                  pl.BlockSpec((1, D), lambda i: (0, 0)),
                  pl.BlockSpec((1, D), lambda i: (0, 0)),
                  pl.BlockSpec((1, D), lambda i: (0, 0))],
        out_specs=pl.BlockSpec((tm, D), lambda i: (i, 0)),
        compiler_params=pltpu.CompilerParams(
            dimension_semantics=("parallel",),
            vmem_limit_bytes=VMEM_LIMIT),
    )(x2d, w1, b1.reshape(1, F), w2, b2.reshape(1, D),
      gamma.reshape(1, D), beta.reshape(1, D))


# ---------------------------------------------------------------------------
# Kernel 4: multi-head attention core
#   - one program per (batch, Sq-tile); padding/causal mask built in-kernel
#   - q/k/v read directly from fused projection output via column BlockSpecs
#   - deferred softmax normalization; single lane-dense (tq, D) output store
# ---------------------------------------------------------------------------

def _make_attn_kernel(num_heads, causal, tq):
    def kernel(q_ref, k_ref, v_ref, kv_valid_ref, o_ref):
        q = q_ref[0]          # (tq, D) bf16   D = H*dh, lane-dense layout
        k = k_ref[0]          # (Sk, D) bf16
        v = v_ref[0]          # (Sk, D) bf16
        Sq, D = q.shape
        Sk = k.shape[0]
        dh = D // num_heads

        # keep-mask built in-kernel: key-padding row + optional causal mask.
        valid = kv_valid_ref[0] > 0.5                     # (1, Sk) bool
        keep = jnp.broadcast_to(valid, (Sq, Sk))
        if causal:
            q_start = pl.program_id(1) * tq
            qi = q_start + lax.broadcasted_iota(jnp.int32, (Sq, Sk), 0)
            ki = lax.broadcasted_iota(jnp.int32, (Sq, Sk), 1)
            keep = jnp.logical_and(keep, ki <= qi)

        outs = []
        for h in range(num_heads):                        # unrolled (small H)
            lo = h * dh
            qh = q[:, lo:lo + dh]
            kh = k[:, lo:lo + dh]
            vh = v[:, lo:lo + dh]
            # contract on the LAST dim of both operands (no k.T transpose);
            # 1/sqrt(dh) is pre-folded into the Q projection weights.
            s = lax.dot_general(qh, kh, (((1,), (1,)), ((), ())),
                                preferred_element_type=jnp.float32)
            s = jnp.where(keep, s, -1e9)                  # masked_fill(mask==0, -1e9)
            s = s - jnp.max(s, axis=-1, keepdims=True)    # stable softmax (f32)
            p = jnp.exp(s)
            l = jnp.sum(p, axis=-1, keepdims=True)
            num = jnp.dot(p.astype(jnp.bfloat16), vh,
                          preferred_element_type=jnp.float32)
            outs.append(num * pl.reciprocal(l, approx=True))
        # single lane-dense store of the full (tq, D) block
        o_ref[0] = jnp.concatenate(outs, axis=-1).astype(o_ref.dtype)
    return kernel


def pallas_attention(q_arr, k_arr, v_arr, key_valid, causal, num_heads, D,
                     qcol, kcol, vcol):
    # q_arr: (B, Sq, qcols*D) bf16, k_arr/v_arr: (B, Sk, *) bf16 (may alias q_arr)
    # key_valid: (B, 1, Sk) f32 (1 = keep).  qcol/kcol/vcol = column block indices.
    B, Sq = q_arr.shape[0], q_arr.shape[1]
    Sk = k_arr.shape[1]
    tq = _pick_tile(Sq, (512, 256, 128))
    kernel = _make_attn_kernel(num_heads, causal, tq)
    return pl.pallas_call(
        kernel,
        out_shape=jax.ShapeDtypeStruct((B, Sq, D), jnp.bfloat16),
        grid=(B, Sq // tq),
        in_specs=[pl.BlockSpec((1, tq, D), lambda b, qi: (b, qi, qcol)),
                  pl.BlockSpec((1, Sk, D), lambda b, qi: (b, 0, kcol)),
                  pl.BlockSpec((1, Sk, D), lambda b, qi: (b, 0, vcol)),
                  pl.BlockSpec((1, 1, Sk), lambda b, qi: (b, 0, 0))],
        out_specs=pl.BlockSpec((1, tq, D), lambda b, qi: (b, qi, 0)),
        compiler_params=pltpu.CompilerParams(
            dimension_semantics=("parallel", "parallel"),
            vmem_limit_bytes=VMEM_LIMIT),
    )(q_arr, k_arr, v_arr, key_valid)


# ---------------------------------------------------------------------------
# Model glue (reshapes, parameter setup, layer composition)
# ---------------------------------------------------------------------------

def positional_encoding(max_len, d_model):
    pos = jnp.arange(max_len, dtype=jnp.float32)[:, None]
    div = jnp.exp(jnp.arange(0, d_model, 2, dtype=jnp.float32)
                  * (-math.log(10000.0) / d_model))
    pe = jnp.zeros((max_len, d_model), jnp.float32)
    pe = pe.at[:, 0::2].set(jnp.sin(pos * div))
    pe = pe.at[:, 1::2].set(jnp.cos(pos * div))
    return pe


def fused_self_attention(x, p, key_valid, causal, num_heads):
    B, S, D = x.shape
    qkv = pallas_matmul_bias(x.reshape(B * S, D), p["wqkv"], p["bqkv"])  # (B*S, 3D) bf16
    qkv = qkv.reshape(B, S, 3 * D)
    # q/k/v selected via column block indices 0/1/2 -> no HBM slices.
    return pallas_attention(qkv, qkv, qkv, key_valid, causal, num_heads, D,
                            qcol=0, kcol=1, vcol=2)


def fused_cross_attention(xq, xkv, p, key_valid, num_heads):
    B, Sq, D = xq.shape
    Sk = xkv.shape[1]
    q = pallas_matmul_bias(xq.reshape(B * Sq, D), p["wq"], p["bq"]).reshape(B, Sq, D)
    kv = pallas_matmul_bias(xkv.reshape(B * Sk, D), p["wkv"], p["bkv"])   # (B*Sk, 2D)
    kv = kv.reshape(B, Sk, 2 * D)
    return pallas_attention(q, kv, kv, key_valid, False, num_heads, D,
                            qcol=0, kcol=0, vcol=1)


def encoder_layer(x, p, src_valid, num_heads):
    B, S, D = x.shape
    a = fused_self_attention(x, p["attn"], src_valid, False, num_heads)
    x = pallas_out_add_ln(a.reshape(B * S, D), x.reshape(B * S, D),
                          p["attn"]["wo"], p["attn"]["bo"],
                          p["ln1_g"], p["ln1_b"]).reshape(B, S, D)
    x = pallas_ffn_add_ln(x.reshape(B * S, D), p["ffn"]["w1"], p["ffn"]["b1"],
                          p["ffn"]["w2"], p["ffn"]["b2"],
                          p["ln2_g"], p["ln2_b"]).reshape(B, S, D)
    return x


def decoder_layer(x, enc, p, src_valid, tgt_valid, num_heads):
    B, S, D = x.shape
    a = fused_self_attention(x, p["self_attn"], tgt_valid, True, num_heads)
    x = pallas_out_add_ln(a.reshape(B * S, D), x.reshape(B * S, D),
                          p["self_attn"]["wo"], p["self_attn"]["bo"],
                          p["ln1_g"], p["ln1_b"]).reshape(B, S, D)
    a = fused_cross_attention(x, enc, p["cross_attn"], src_valid, num_heads)
    x = pallas_out_add_ln(a.reshape(B * S, D), x.reshape(B * S, D),
                          p["cross_attn"]["wo"], p["cross_attn"]["bo"],
                          p["ln2_g"], p["ln2_b"]).reshape(B, S, D)
    x = pallas_ffn_add_ln(x.reshape(B * S, D), p["ffn"]["w1"], p["ffn"]["b1"],
                          p["ffn"]["w2"], p["ffn"]["b2"],
                          p["ln3_g"], p["ln3_b"]).reshape(B, S, D)
    return x


def transformer_forward(params, src, tgt, num_heads):
    B, Ss = src.shape
    St = tgt.shape[1]
    D = params["enc_emb"].shape[1]

    # generate_mask equivalents: key-padding validity rows only; the causal
    # (no-peek) part of tgt_mask is built inside the attention kernel.
    src_valid = (src != 0).astype(jnp.float32).reshape(B, 1, Ss)
    tgt_valid = (tgt != 0).astype(jnp.float32).reshape(B, 1, St)

    # TODO(synk): dropout is treated as identity (eval-mode); stochastic dropout not reproduced.
    pe = params["pe"]
    enc = (jnp.take(params["enc_emb"], src, axis=0)
           + pe[None, :Ss, :]).astype(jnp.bfloat16)
    dec = (jnp.take(params["dec_emb"], tgt, axis=0)
           + pe[None, :St, :]).astype(jnp.bfloat16)

    for lp in params["enc_layers"]:
        enc = encoder_layer(enc, lp, src_valid, num_heads)
    for lp in params["dec_layers"]:
        dec = decoder_layer(dec, enc, lp, src_valid, tgt_valid, num_heads)

    out = pallas_matmul_bias(dec.reshape(B * St, D), params["fc_w"],
                             params["fc_b"], out_dtype=jnp.float32)
    return out.reshape(B, St, -1)


def init_params(key, src_vocab, tgt_vocab, d_model, num_heads, num_layers,
                d_ff, max_len):
    keys = jax.random.split(key, 8 + num_layers * 48)
    kit = iter(keys)
    dh = d_model // num_heads
    scale = 1.0 / math.sqrt(dh)

    def dense(fin, fout):
        w = 0.02 * jax.random.normal(next(kit), (fin, fout), jnp.float32)
        return w, jnp.zeros((fout,), jnp.float32)

    def attn_self():
        wq, bq = dense(d_model, d_model)
        wk, bk = dense(d_model, d_model)
        wv, bv = dense(d_model, d_model)
        wo, bo = dense(d_model, d_model)
        # 1/sqrt(dh) folded into the Q projection; weights stored bf16.
        wqkv = jnp.concatenate([wq * scale, wk, wv], axis=1).astype(jnp.bfloat16)
        bqkv = jnp.concatenate([bq * scale, bk, bv], axis=0)
        return {"wqkv": wqkv, "bqkv": bqkv,
                "wo": wo.astype(jnp.bfloat16), "bo": bo}

    def attn_cross():
        wq, bq = dense(d_model, d_model)
        wk, bk = dense(d_model, d_model)
        wv, bv = dense(d_model, d_model)
        wo, bo = dense(d_model, d_model)
        return {"wq": (wq * scale).astype(jnp.bfloat16), "bq": bq * scale,
                "wkv": jnp.concatenate([wk, wv], axis=1).astype(jnp.bfloat16),
                "bkv": jnp.concatenate([bk, bv], axis=0),
                "wo": wo.astype(jnp.bfloat16), "bo": bo}

    def ffn_params():
        w1, b1 = dense(d_model, d_ff)
        w2, b2 = dense(d_ff, d_model)
        return {"w1": w1.astype(jnp.bfloat16), "b1": b1,
                "w2": w2.astype(jnp.bfloat16), "b2": b2}

    def ln():
        return jnp.ones((d_model,), jnp.float32), jnp.zeros((d_model,), jnp.float32)

    params = {
        "enc_emb": 0.02 * jax.random.normal(next(kit), (src_vocab, d_model), jnp.float32),
        "dec_emb": 0.02 * jax.random.normal(next(kit), (tgt_vocab, d_model), jnp.float32),
        "pe": positional_encoding(max_len, d_model),
        "enc_layers": [],
        "dec_layers": [],
    }
    for _ in range(num_layers):
        g1, b1 = ln(); g2, b2 = ln()
        params["enc_layers"].append({
            "attn": attn_self(), "ffn": ffn_params(),
            "ln1_g": g1, "ln1_b": b1, "ln2_g": g2, "ln2_b": b2,
        })
    for _ in range(num_layers):
        g1, b1 = ln(); g2, b2 = ln(); g3, b3 = ln()
        params["dec_layers"].append({
            "self_attn": attn_self(), "cross_attn": attn_cross(),
            "ffn": ffn_params(),
            "ln1_g": g1, "ln1_b": b1, "ln2_g": g2, "ln2_b": b2,
            "ln3_g": g3, "ln3_b": b3,
        })
    fc_w, fc_b = dense(d_model, tgt_vocab)
    params["fc_w"], params["fc_b"] = fc_w.astype(jnp.bfloat16), fc_b
    return params


if __name__ == "__main__":
    # d_model is a multiple of 128 so the fused-QKV column BlockSpecs are
    # lane-tile aligned; other dims stay small.
    src_vocab, tgt_vocab = 50, 50
    d_model, num_heads, num_layers, d_ff, max_len = 128, 4, 2, 256, 64
    B, Ss, St = 2, 8, 8

    key = jax.random.PRNGKey(0)
    kp, ks, kt = jax.random.split(key, 3)
    params = init_params(kp, src_vocab, tgt_vocab, d_model, num_heads,
                         num_layers, d_ff, max_len)

    src = jax.random.randint(ks, (B, Ss), 1, src_vocab, dtype=jnp.int32)
    tgt = jax.random.randint(kt, (B, St), 1, tgt_vocab, dtype=jnp.int32)
    # add some padding tokens so the padding masks are exercised
    src = src.at[:, -1].set(0)
    tgt = tgt.at[:, -1].set(0)

    out = transformer_forward(params, src, tgt, num_heads)
    out = jax.block_until_ready(out)
    assert out.shape == (B, St, tgt_vocab)
    assert bool(jnp.all(jnp.isfinite(out)))
    print("KERNEL_OK")
</pallas_src>

<mosaic_0001>
module attributes {stable_mosaic.version = 11 : i64} {
  func.func @_matmul_bias_kernel(%arg0: i32, %arg1: i32, %arg2: i32, %arg3: memref<16x128xbf16, #tpu.memory_space<vmem>>, %arg4: memref<128x128xbf16, #tpu.memory_space<vmem>>, %arg5: memref<1x128xf32, #tpu.memory_space<vmem>>, %arg6: memref<16x128xbf16, #tpu.memory_space<vmem>>, %arg7: memref<16x128xf32, #tpu.memory_space<vmem>>) attributes {dimension_semantics = [#tpu.dimension_semantics<parallel>, #tpu.dimension_semantics<parallel>, #tpu.dimension_semantics<arbitrary>], iteration_bounds = array<i64: 1, 3, 1>, scalar_prefetch = 0 : i64, scratch_operands = 1 : i64, tpu.core_type = #tpu.core_type<tc>, window_params = [{transform_indices = @transform_0, window_bounds = array<i64: 16, 128>}, {transform_indices = @transform_1, window_bounds = array<i64: 128, 128>}, {transform_indices = @transform_2, window_bounds = array<i64: 1, 128>}, {transform_indices = @transform_3, window_bounds = array<i64: 16, 128>}]} {
    %c0_i32 = arith.constant 0 : i32
    %0 = arith.cmpi eq, %arg2, %c0_i32 : i32
    %1 = arith.extui %0 : i1 to i32
    %c0_i32_0 = arith.constant 0 : i32
    %2 = arith.cmpi ne, %1, %c0_i32_0 : i32
    scf.if %2 {
      %cst_10 = arith.constant 0.000000e+00 : f32
      %12 = vector.broadcast %cst_10 : f32 to vector<16x128xf32>
      %c0_11 = arith.constant 0 : index
      %c0_12 = arith.constant 0 : index
      %13 = vector.load %arg7[%c0_11, %c0_12] : memref<16x128xf32, #tpu.memory_space<vmem>>, vector<16x128xf32>
      tpu.vector_store %arg7[%c0_11, %c0_12], %12 {strides = array<i32>} : memref<16x128xf32, #tpu.memory_space<vmem>>, vector<16x128xf32>,
    } else {
    }
    %c0 = arith.constant 0 : index
    %c0_1 = arith.constant 0 : index
    %3 = vector.load %arg7[%c0, %c0_1] : memref<16x128xf32, #tpu.memory_space<vmem>>, vector<16x128xf32>
    %c0_2 = arith.constant 0 : index
    %c0_3 = arith.constant 0 : index
    %4 = vector.load %arg3[%c0_2, %c0_3] : memref<16x128xbf16, #tpu.memory_space<vmem>>, vector<16x128xbf16>
    %c0_4 = arith.constant 0 : index
    %c0_5 = arith.constant 0 : index
    %5 = vector.load %arg4[%c0_4, %c0_5] : memref<128x128xbf16, #tpu.memory_space<vmem>>, vector<128x128xbf16>
    %cst = arith.constant dense<0.000000e+00> : vector<16x128xf32>
    %6 = tpu.matmul %4, %5, %cst {dimension_numbers = #tpu.dot_dimension_numbers<[1], [0], [0], [1], [0, 0, 1, 1], [], []>} : vector<16x128xbf16>, vector<128x128xbf16>, vector<16x128xf32> -> vector<16x128xf32>
    %7 = arith.addf %3, %6 : vector<16x128xf32>
    %c0_6 = arith.constant 0 : index
    %c0_7 = arith.constant 0 : index
    %8 = vector.load %arg7[%c0_6, %c0_7] : memref<16x128xf32, #tpu.memory_space<vmem>>, vector<16x128xf32>
    tpu.vector_store %arg7[%c0_6, %c0_7], %7 {strides = array<i32>} : memref<16x128xf32, #tpu.memory_space<vmem>>, vector<16x128xf32>,
    %c0_i32_8 = arith.constant 0 : i32
    %9 = arith.cmpi eq, %arg2, %c0_i32_8 : i32
    %10 = arith.extui %9 : i1 to i32
    %c0_i32_9 = arith.constant 0 : i32
    %11 = arith.cmpi ne, %10, %c0_i32_9 : i32
    scf.if %11 {
      %c0_10 = arith.constant 0 : index
      %c0_11 = arith.constant 0 : index
      %12 = vector.load %arg7[%c0_10, %c0_11] : memref<16x128xf32, #tpu.memory_space<vmem>>, vector<16x128xf32>
      %c0_12 = arith.constant 0 : index
      %c0_13 = arith.constant 0 : index
      %13 = vector.load %arg5[%c0_12, %c0_13] : memref<1x128xf32, #tpu.memory_space<vmem>>, vector<1x128xf32>
      %14 = vector.broadcast %13 : vector<1x128xf32> to vector<16x128xf32>
      %15 = arith.addf %12, %14 : vector<16x128xf32>
      %16 = arith.truncf %15 : vector<16x128xf32> to vector<16x128xbf16>
      %c0_14 = arith.constant 0 : index
      %c0_15 = arith.constant 0 : index
      %17 = vector.load %arg6[%c0_14, %c0_15] : memref<16x128xbf16, #tpu.memory_space<vmem>>, vector<16x128xbf16>
      tpu.vector_store %arg6[%c0_14, %c0_15], %16 {strides = array<i32>} : memref<16x128xbf16, #tpu.memory_space<vmem>>, vector<16x128xbf16>,
    } else {
    }
    return
  }
  func.func @transform_0(%arg0: i32, %arg1: i32, %arg2: i32) -> (i32, i32) {
    %c0_i32 = arith.constant 0 : i32
    return %arg0, %arg2 : i32, i32
  }
  func.func @transform_1(%arg0: i32, %arg1: i32, %arg2: i32) -> (i32, i32) {
    %c0_i32 = arith.constant 0 : i32
    return %arg2, %arg1 : i32, i32
  }
  func.func @transform_2(%arg0: i32, %arg1: i32, %arg2: i32) -> (i32, i32) {
    %c0_i32 = arith.constant 0 : i32
    %c0_i32_0 = arith.constant 0 : i32
    return %c0_i32, %arg1 : i32, i32
  }
  func.func @transform_3(%arg0: i32, %arg1: i32, %arg2: i32) -> (i32, i32) {
    %c0_i32 = arith.constant 0 : i32
    return %arg0, %arg1 : i32, i32
  }
}

</mosaic_0001>

<llo_original>
// kernel: tpu_custom_call.1
$region0: #{tpu_custom_call.1}
  #allocation0 [shape = 'u32[]', space=smem, size = 0x4, offset = 0x4, fixed_abs, tag = 'smem constant byte address 0x4 - core index']
  #allocation1 [shape = 'u32[144,128]{1,0:T(1,128)}', space=vmem, size = 0x12000, scoped, tag = 'internal scratch']
  #allocation2 [shape = 'f32[16,128]{1,0:T(8,128)}', space=vmem, size = 0x2000, scoped, tag = 'scratch operand']
  %s0 = inlined_call_operand.hbm [shape: bf16[16,128], index: 0, kind: input, shape index: {}]
  %s1 = inlined_call_operand.hbm [shape: bf16[128,384], index: 1, kind: input, shape index: {}]
  %s2 = inlined_call_operand.vmem [shape: f32[1,384], index: 2, kind: input, shape index: {}]
  %s3 = inlined_call_operand.hbm [shape: bf16[16,384], index: 3, kind: output, shape index: {}]
  %s4 = sld [smem:[#allocation0]]
  $region61: #{tpu_custom_call.1} parent=0
    _
  %s6 = ssub.s32 1, %s4
  %s7 = scalar_select 0, %s6, %s4
  $region1: #{tpu_custom_call.1} parent=0
    #allocation3 [shape = 'u8[4096]{0}', space=vmem, size = 0x1000, scoped, tag = 'input window, operand 0, single buffered']
    #allocation4 [shape = 's32[2]{0}', space=sflag, size = 0x8, scoped, tag = 'scoped memory for tpu_custom_call.1']
    #allocation5 [shape = 's32[2]{0}', space=sflag, size = 0x8, scoped, tag = 'scoped memory for tpu_custom_call.1']
    #allocation6 [shape = 'u8[65536]{0}', space=vmem, size = 0x10000, scoped, tag = 'input window, operand 1']
    #allocation7 [shape = 's32[2]{0}', space=sflag, size = 0x8, scoped, tag = 'scoped memory for tpu_custom_call.1']
    #allocation8 [shape = 'u8[8192]{0}', space=vmem, size = 0x2000, scoped, tag = 'output window, operand 0']
    %8 = vsyncpa [#allocation4], 0
    %9 = vsyncpa [#allocation7], 0
    %s10 = scalar_lea.sflag [#allocation7], 1
    %11 = vsyncpa %s10, 0
    %12 = vsyncpa [#allocation5], 0
    %s13 = scalar_lea.sflag [#allocation5], 1
    %14 = vsyncpa %s13, 0
    loop: start=0, step=1, limit=5
    $region2: #{tpu_custom_call.1} parent=1 // loop_pre_header
      _
    $region3: #{tpu_custom_call.1} parent=1 // loop_header
      %s16 = sphi 0, %s20
      %p17 = scmp.ge.s32.totalorder %s16, 5
      %s23 = sphi 0, %s42
      %s24 = sphi 0, %s38
      %s25 = sphi 0, %s34
      %s26 = sphi 0, %s23
      %s27 = sphi 0, %s24
      %s28 = sphi 0, %s25
      %s29 = sphi 0, %s26
      %s30 = sphi 0, %s27
      %s31 = sphi 0, %s28
      %s47 = sphi 0, %s49
      %s50 = sphi 0, %s47
      %s51 = sphi 0, %s50
      %s67 = sphi 0, %s51
      %s75 = sphi 0, %s77
      %s78 = sphi 0, %s75
      %s79 = sphi 0, %s78
      %s95 = sphi 0, %s79
      %s101 = sphi 0, %s103
      %s104 = sphi 0, %s101
      %s105 = sphi 0, %s104
      %s121 = sphi 0, %s105
      %s129 = sphi 0, %s131
      %s132 = sphi 0, %s129
      %s133 = sphi 0, %s132
      %s149 = sphi 0, %s133
    $region4: #{tpu_custom_call.1} parent=1 // loop_header_branch
      %19 = sbr.rel (%p17) target = $region8
    $region5: #{tpu_custom_call.1} parent=1 // loop_body
      %s21 = ssub.s32 %s16, 1
      %s22 = ssub.s32 %s16, 2
      %s32 = sadd.s32 1, %s25
      %p33 = scmp.ge.s32.totalorder %s32, 1
      %s34 = scalar_select %p33, 0, %s32
      %s35 = sadd.s32 1, %s24
      %s36 = scalar_select %p33, %s35, %s24
      %p37 = scmp.ge.s32.totalorder %s36, 3
      %s38 = scalar_select %p37, 0, %s36
      %s39 = sadd.s32 1, %s23
      %s40 = scalar_select %p37, %s39, %s23
      %p41 = scmp.ge.s32.totalorder %s40, 1
      %s42 = scalar_select %p41, 0, %s40
      %s43 = ssub.s32 %s23, %s42
      %s44 = ssub.s32 %s25, %s34
      %s45 = sor.u32 %s43, %s44
      %p46 = scmp.eq.s32.totalorder %s45, 0
      %s48 = sadd.s32 %s47, 1
      %s49 = scalar_select %p46, %s47, %s48
      %p52 = pneg %p46
      %p53 = scmp.eq.s32.totalorder %s16, 2
      %p54 = por %p52, %p53
      %p55 = scmp.ne.s32.totalorder %s47, %s50
      %p56 = scmp.eq.s32.totalorder %s16, 0
      %p57 = por %p55, %p56
      %p58 = scmp.ne.s32.totalorder %s47, %s50
      %p59 = scmp.eq.s32.totalorder %s21, 2
      %p60 = por %p58, %p59
      %p61 = scmp.ne.s32.totalorder %s50, %s51
      %p62 = scmp.eq.s32.totalorder %s21, 0
      %p63 = por %p61, %p62
      %p64 = scmp.ne.s32.totalorder %s50, %s51
      %p65 = scmp.eq.s32.totalorder %s22, 2
      %p66 = por %p64, %p65
      %p68 = scmp.ne.s32.totalorder %s51, %s67
      %p69 = scmp.eq.s32.totalorder %s22, 0
      %p70 = por %p68, %p69
      %s71 = ssub.s32 %s25, %s34
      %s72 = ssub.s32 %s24, %s38
      %s73 = sor.u32 %s71, %s72
      %p74 = scmp.eq.s32.totalorder %s73, 0
      %s76 = sadd.s32 %s75, 1
      %s77 = scalar_select %p74, %s75, %s76
      %p80 = pneg %p74
      %p81 = scmp.eq.s32.totalorder %s16, 2
      %p82 = por %p80, %p81
      %p83 = scmp.ne.s32.totalorder %s75, %s78
      %p84 = scmp.eq.s32.totalorder %s16, 0
      %p85 = por %p83, %p84
      %p86 = scmp.ne.s32.totalorder %s75, %s78
      %p87 = scmp.eq.s32.totalorder %s21, 2
      %p88 = por %p86, %p87
      %p89 = scmp.ne.s32.totalorder %s78, %s79
      %p90 = scmp.eq.s32.totalorder %s21, 0
      %p91 = por %p89, %p90
      %p92 = scmp.ne.s32.totalorder %s78, %s79
      %p93 = scmp.eq.s32.totalorder %s22, 2
      %p94 = por %p92, %p93
      %p96 = scmp.ne.s32.totalorder %s79, %s95
      %p97 = scmp.eq.s32.totalorder %s22, 0
      %p98 = por %p96, %p97
      %s99 = ssub.s32 %s24, %s38
      %p100 = scmp.eq.s32.totalorder %s99, 0
      %s102 = sadd.s32 %s101, 1
      %s103 = scalar_select %p100, %s101, %s102
      %p106 = pneg %p100
      %p107 = scmp.eq.s32.totalorder %s16, 2
      %p108 = por %p106, %p107
      %p109 = scmp.ne.s32.totalorder %s101, %s104
      %p110 = scmp.eq.s32.totalorder %s16, 0
      %p111 = por %p109, %p110
      %p112 = scmp.ne.s32.totalorder %s101, %s104
      %p113 = scmp.eq.s32.totalorder %s21, 2
      %p114 = por %p112, %p113
      %p115 = scmp.ne.s32.totalorder %s104, %s105
      %p116 = scmp.eq.s32.totalorder %s21, 0
      %p117 = por %p115, %p116
      %p118 = scmp.ne.s32.totalorder %s104, %s105
      %p119 = scmp.eq.s32.totalorder %s22, 2
      %p120 = por %p118, %p119
      %p122 = scmp.ne.s32.totalorder %s105, %s121
      %p123 = scmp.eq.s32.totalorder %s22, 0
      %p124 = por %p122, %p123
      %s125 = ssub.s32 %s23, %s42
      %s126 = ssub.s32 %s24, %s38
      %s127 = sor.u32 %s125, %s126
      %p128 = scmp.eq.s32.totalorder %s127, 0
      %s130 = sadd.s32 %s129, 1
      %s131 = scalar_select %p128, %s129, %s130
      %p134 = pneg %p128
      %p135 = scmp.eq.s32.totalorder %s16, 2
      %p136 = por %p134, %p135
      %p137 = scmp.ne.s32.totalorder %s129, %s132
      %p138 = scmp.eq.s32.totalorder %s16, 0
      %p139 = por %p137, %p138
      %p140 = scmp.ne.s32.totalorder %s129, %s132
      %p141 = scmp.eq.s32.totalorder %s21, 2
      %p142 = por %p140, %p141
      %p143 = scmp.ne.s32.totalorder %s132, %s133
      %p144 = scmp.eq.s32.totalorder %s21, 0
      %p145 = por %p143, %p144
      %p146 = scmp.ne.s32.totalorder %s132, %s133
      %p147 = scmp.eq.s32.totalorder %s22, 2
      %p148 = por %p146, %p147
      %p150 = scmp.ne.s32.totalorder %s133, %s149
      %p151 = scmp.eq.s32.totalorder %s22, 0
      %p152 = por %p150, %p151
      %p153 = scmp.le.s32.totalorder 1, %s16
      %p154 = scmp.lt.s32.totalorder %s16, 4
      %p155 = pnand %p153, %p154
      %p156 = pneg %p155
      // Predicated region
      $region9: #{tpu_custom_call.1} parent=5 // pred_check
        _
      $region10: #{tpu_custom_call.1} parent=5 // pred_check_branch
        %158 = sbr.rel (%p155) target = $region12
      $region11: #{tpu_custom_call.1} parent=5 // pred_region
        %s159 = ssub.s32 %s16, 1
        // Predicated region
        $region13: #{tpu_custom_call.1} parent=11 // pred_check
          %p160 = pneg %p63
        $region14: #{tpu_custom_call.1} parent=11 // pred_check_branch
          %162 = sbr.rel (%p160) target = $region16
        $region15: #{tpu_custom_call.1} parent=11 // pred_region
          %s163 = smul.u32 2, %s26
          %s165 = ssub.s32 128, 128
          %166 = vsyncadd [#allocation4], %s165
          %s167 = sadd.s32 %s28, %s163
          %s168 = smul.addr %s167, 64
          %s169 = scalar_lea.hbm %s0, %s168
          %s170 = sshll.u32 [#allocation3], 4
          %s171 = int_to_ptr.vmem [resolvable:$true] %s170
          %176 = dma.hbm_to_vmem [thread:$0]  %s169, 128, %s171, [#allocation4], 64, 64, 4
        $region16: #{tpu_custom_call.1} parent=11 // pred_fallthru
          _
      $region12: #{tpu_custom_call.1} parent=5 // pred_fallthru
        _
      %p177 = scmp.lt.s32.totalorder %s16, 3
      // Predicated region
      $region17: #{tpu_custom_call.1} parent=5 // pred_check
        %p178 = pneg %p177
      $region18: #{tpu_custom_call.1} parent=5 // pred_check_branch
        %180 = sbr.rel (%p178) target = $region20
      $region19: #{tpu_custom_call.1} parent=5 // pred_region
        // Predicated region
        $region21: #{tpu_custom_call.1} parent=19 // pred_check
          %p181 = pneg %p85
        $region22: #{tpu_custom_call.1} parent=19 // pred_check_branch
          %183 = sbr.rel (%p181) target = $region24
        $region23: #{tpu_custom_call.1} parent=19 // pred_region
          %s184 = sand.u32 %s75, 1
          %s185 = scalar_lea.sflag [#allocation7], %s184
          %s186 = sand.u32 %s75, 1
          %s187 = smul.addr %s186, 64
          %s188 = scalar_lea.vmem [#allocation6], %s187
          %s189 = smul.u32 16, %s25
          %s191 = ssub.s32 1024, 1024
          %192 = vsyncadd %s185, %s191
          %s193 = smul.addr %s189, 3
          %s194 = sadd.s32 %s24, %s193
          %s195 = smul.addr %s194, 64
          %s196 = scalar_lea.hbm %s1, %s195
          %s197 = sshll.u32 %s188, 4
          %s198 = int_to_ptr.vmem [resolvable:$true] %s197
          %203 = dma.hbm_to_vmem [thread:$0]  %s196, 1024, %s198, %s185, 192, 64, 4
        $region24: #{tpu_custom_call.1} parent=19 // pred_fallthru
          _
        // Predicated region
        $region25: #{tpu_custom_call.1} parent=19 // pred_check
          %p204 = pneg %p111
        $region26: #{tpu_custom_call.1} parent=19 // pred_check_branch
          %206 = sbr.rel (%p204) target = $region28
        $region27: #{tpu_custom_call.1} parent=19 // pred_region
          %p207 = scmp.lt.s32.totalorder %s24, 2
          %s208 = scalar_select %p207, %s24, 2
          %s209 = scalar_lea.vmem %s2, %s208
        $region28: #{tpu_custom_call.1} parent=19 // pred_fallthru
          _
      $region20: #{tpu_custom_call.1} parent=5 // pred_fallthru
        _
      %p210 = scmp.le.s32.totalorder 1, %s16
      %p211 = scmp.lt.s32.totalorder %s16, 4
      %p212 = pnand %p210, %p211
      %p213 = pneg %p212
      // Predicated region
      $region29: #{tpu_custom_call.1} parent=5 // pred_check
        _
      $region30: #{tpu_custom_call.1} parent=5 // pred_check_branch
        %215 = sbr.rel (%p212) target = $region32
      $region31: #{tpu_custom_call.1} parent=5 // pred_region
        %s216 = ssub.s32 %s16, 1
        // Predicated region
        $region33: #{tpu_custom_call.1} parent=31 // pred_check
          %p217 = pneg %p63
        $region34: #{tpu_custom_call.1} parent=31 // pred_check_branch
          %219 = sbr.rel (%p217) target = $region36
        $region35: #{tpu_custom_call.1} parent=31 // pred_region
          %220 = dma.done [#allocation4], 128
        $region36: #{tpu_custom_call.1} parent=31 // pred_fallthru
          _
        %s221 = sand.u32 %s78, 1
        %s222 = scalar_lea.sflag [#allocation7], %s221
        %s223 = sand.u32 %s78, 1
        %s224 = smul.addr %s223, 64
        %s225 = scalar_lea.vmem [#allocation6], %s224
        // Predicated region
        $region37: #{tpu_custom_call.1} parent=31 // pred_check
          %p226 = pneg %p91
        $region38: #{tpu_custom_call.1} parent=31 // pred_check_branch
          %228 = sbr.rel (%p226) target = $region40
        $region39: #{tpu_custom_call.1} parent=31 // pred_region
          %229 = dma.done %s222, 1024
        $region40: #{tpu_custom_call.1} parent=31 // pred_fallthru
          _
        %p230 = pneg %p63
        %p231 = pneg %p60
        %s232 = sand.u32 %s78, 1
        %s233 = scalar_lea.sflag [#allocation7], %s232
        %s234 = sand.u32 %s78, 1
        %s235 = smul.addr %s234, 64
        %s236 = scalar_lea.vmem [#allocation6], %s235
        %p237 = pneg %p91
        %p238 = pneg %p88
        %p239 = scmp.lt.s32.totalorder %s27, 2
        %s240 = scalar_select %p239, %s27, 2
        %s241 = scalar_lea.vmem %s2, %s240
        %p242 = pneg %p117
        %p243 = pneg %p114
        %p244 = pneg %p145
        %p245 = pneg %p142
        %s246 = sand.u32 %s132, 1
        %s247 = scalar_lea.sflag [#allocation5], %s246
        %s248 = sand.u32 %s132, 1
        %s249 = smul.addr %s248, 8
        %s250 = scalar_lea.vmem [#allocation8], %s249
        %s251 = smul.u32 2, %s26
        %s252 = smul.u32 16, %s28
        %p253 = scmp.lt.s32.totalorder %s27, 2
        %s254 = scalar_select %p253, %s27, 2
        %s255 = scalar_lea.vmem %s2, %s254
        %s256 = smul.u32 2, %s26
        %p258 = scmp.eq.s32.totalorder %s28, 0
        // Predicated region
        $region41: #{tpu_custom_call.1} parent=31 // pred_check
          %p259 = pneg %p258
        $region42: #{tpu_custom_call.1} parent=31 // pred_check_branch
          %261 = sbr.rel (%p259) target = $region44
        $region43: #{tpu_custom_call.1} parent=31 // pred_region
          %262 = vst [vmem:[#allocation2] sm:$0xff] 0.0
          %263 = vst [vmem:[#allocation2 + $0x8] sm:$0xff] 0.0
        $region44: #{tpu_custom_call.1} parent=31 // pred_fallthru
          _
        %v264 = vld [vmem:[#allocation2] sm:$0xff]
        %v265 = vld [vmem:[#allocation2 + $0x8] sm:$0xff]
        %v266 = vld [vmem:[#allocation3] sm:$0xf]
        %v267 = vld [vmem:[#allocation3 + $0x4] sm:$0xf]
        %v268 = vld [vmem:[%s225] sm:$0xf]
        %v269 = vld [vmem:[%s225 + $0x4] sm:$0xf]
        %v270 = vld [vmem:[%s225 + $0x8] sm:$0xf]
        %v271 = vld [vmem:[%s225 + $0xc] sm:$0xf]
        %v272 = vld [vmem:[%s225 + $0x10] sm:$0xf]
        %v273 = vld [vmem:[%s225 + $0x14] sm:$0xf]
        %v274 = vld [vmem:[%s225 + $0x18] sm:$0xf]
        %v275 = vld [vmem:[%s225 + $0x1c] sm:$0xf]
        %v276 = vld [vmem:[%s225 + $0x20] sm:$0xf]
        %v277 = vld [vmem:[%s225 + $0x24] sm:$0xf]
        %v278 = vld [vmem:[%s225 + $0x28] sm:$0xf]
        %v279 = vld [vmem:[%s225 + $0x2c] sm:$0xf]
        %v280 = vld [vmem:[%s225 + $0x30] sm:$0xf]
        %v281 = vld [vmem:[%s225 + $0x34] sm:$0xf]
        %v282 = vld [vmem:[%s225 + $0x38] sm:$0xf]
        %v283 = vld [vmem:[%s225 + $0x3c] sm:$0xf]
        %v286 = vunpack.c.l.b16 %v266
        %v287 = vunpack.c.l.b16 %v267
        %v288 = vpack.c.b16 %v287, %v286
        %v306 = vunpack.c.l.b16 %v268
        %v307 = vunpack.c.l.b16 %v269
        %v308 = vunpack.c.l.b16 %v270
        %v309 = vunpack.c.l.b16 %v271
        %v310 = vunpack.c.l.b16 %v272
        %v311 = vunpack.c.l.b16 %v273
        %v312 = vunpack.c.l.b16 %v274
        %v313 = vunpack.c.l.b16 %v275
        %v314 = vunpack.c.l.b16 %v276
        %v315 = vunpack.c.l.b16 %v277
        %v316 = vunpack.c.l.b16 %v278
        %v317 = vunpack.c.l.b16 %v279
        %v318 = vunpack.c.l.b16 %v280
        %v319 = vunpack.c.l.b16 %v281
        %v320 = vunpack.c.l.b16 %v282
        %v321 = vunpack.c.l.b16 %v283
        %v322 = vpack.c.b16 %v307, %v306
        %v323 = vpack.c.b16 %v309, %v308
        %v324 = vpack.c.b16 %v311, %v310
        %v325 = vpack.c.b16 %v313, %v312
        %v326 = vpack.c.b16 %v315, %v314
        %v327 = vpack.c.b16 %v317, %v316
        %v328 = vpack.c.b16 %v319, %v318
        %v329 = vpack.c.b16 %v321, %v320
        %338 = vmatprep.subr.bf16.mxu0 0
        %339 = vmatpush1.bf16.msra.mxu0 %v329
        %340 = vmatprep.subr.bf16.mxu0 0
        %341 = vmatpush1.bf16.msra.mxu0 %v328
        %342 = vmatprep.subr.bf16.mxu0 0
        %343 = vmatpush1.bf16.msra.mxu0 %v327
        %344 = vmatprep.subr.bf16.mxu0 0
        %345 = vmatpush1.bf16.msra.mxu0 %v326
        %346 = vmatprep.subr.bf16.mxu0 0
        %347 = vmatpush1.bf16.msra.mxu0 %v325
        %348 = vmatprep.subr.bf16.mxu0 0
        %349 = vmatpush1.bf16.msra.mxu0 %v324
        %350 = vmatprep.subr.bf16.mxu0 0
        %351 = vmatpush1.bf16.msra.mxu0 %v323
        %352 = vmatprep.subr.bf16.mxu0 0
        %353 = vmatpush1.bf16.msra.mxu0 %v322
        %354 = vmatprep.subr.bf16.mxu0 0
        %355 = vmatpush2.bf16.msra.mxu0 0
        %356 = vmatprep.subr.bf16.mxu0 0
        %357 = vmatpush2.bf16.msra.mxu0 0
        %358 = vmatprep.subr.bf16.mxu0 0
        %359 = vmatpush2.bf16.msra.mxu0 0
        %360 = vmatprep.subr.bf16.mxu0 0
        %361 = vmatpush2.bf16.msra.mxu0 0
        %362 = vmatprep.subr.bf16.mxu0 0
        %363 = vmatpush2.bf16.msra.mxu0 0
        %364 = vmatprep.subr.bf16.mxu0 0
        %365 = vmatpush2.bf16.msra.mxu0 0
        %366 = vmatprep.subr.bf16.mxu0 0
        %367 = vmatpush2.bf16.msra.mxu0 0
        %368 = vmatprep.subr.bf16.mxu0 0
        %369 = vmatpush2.bf16.msra.mxu0 0
        %370 = vmatprep.mubr.bf16.mxu0 0
        %371 = vmatmul.mubr.bf16.gmra.mxu0 %v288
        %v372 = vpop.f32.mrf.mxu0
        %v373 = vadd.f32 0.0, %v372
        %v374 = vpop.f32.mrf.mxu0
        %v375 = vpop.f32.mrf.mxu0
        %v376 = vadd.f32 0.0, %v375
        %v377 = vpop.f32.mrf.mxu0
        %378 = vdwg.mxu0
        %v379 = vadd.f32 %v264, %v373
        %v380 = vadd.f32 %v265, %v376
        %381 = vst [vmem:[#allocation2] sm:$0xff] %v379
        %382 = vst [vmem:[#allocation2 + $0x8] sm:$0xff] %v380
        // Predicated region
        $region45: #{tpu_custom_call.1} parent=31 // pred_check
          %p383 = pneg %p258
        $region46: #{tpu_custom_call.1} parent=31 // pred_check_branch
          %385 = sbr.rel (%p383) target = $region48
        $region47: #{tpu_custom_call.1} parent=31 // pred_region
          %v386 = vld [vmem:[#allocation2] sm:$0xff]
          %v387 = vld [vmem:[#allocation2 + $0x8] sm:$0xff]
          %v388 = vld [vmem:[%s255] sm:$0x1]
          %v390 = vlaneseq
          %v391 = vshrl.u32 %v390, 7
          %v392 = vsub.s32 0, %v391
          %v393 = vrot.slane %v388, %v392
          %v395 = vadd.f32 %v386, %v393
          %v396 = vadd.f32 %v387, %v393
          %v397 = vpack.c.bf16 %v396, %v395
          %v399 = vunpack.c.l.b16 %v397
          %v400 = vunpack.c.h.b16 %v397
          %v401 = vpack.c.b16 %v399, %v399
          %v402 = vpack.c.b16 %v400, %v400
          %405 = vst [vmem:[%s250] sm:$0xf] %v401
          %406 = vst [vmem:[%s250 + $0x4] sm:$0xf] %v402
        $region48: #{tpu_custom_call.1} parent=31 // pred_fallthru
          _
        %s407 = sand.u32 %s132, 1
        %s408 = scalar_lea.sflag [#allocation5], %s407
        %s409 = sand.u32 %s132, 1
        %s410 = smul.addr %s409, 8
        %s411 = scalar_lea.vmem [#allocation8], %s410
        // Predicated region
        $region49: #{tpu_custom_call.1} parent=31 // pred_check
          %p412 = pneg %p142
        $region50: #{tpu_custom_call.1} parent=31 // pred_check_branch
          %414 = sbr.rel (%p412) target = $region52
        $region51: #{tpu_custom_call.1} parent=31 // pred_region
          %s415 = smul.u32 2, %s26
          %s417 = ssub.s32 128, 128
          %418 = vsyncadd %s408, %s417
          %s419 = smul.addr %s415, 3
          %s420 = sadd.s32 %s27, %s419
          %s421 = smul.addr %s420, 64
          %s422 = scalar_lea.hbm %s3, %s421
          %s423 = sshll.u32 %s411, 4
          %s424 = int_to_ptr.vmem [resolvable:$true] %s423
          %429 = dma.vmem_to_hbm [thread:$0]  %s424, 128, %s422, %s408, 64, 192, 4
        $region52: #{tpu_custom_call.1} parent=31 // pred_fallthru
          _
      $region32: #{tpu_custom_call.1} parent=5 // pred_fallthru
        _
      %p430 = scmp.le.s32.totalorder 2, %s16
      // Predicated region
      $region53: #{tpu_custom_call.1} parent=5 // pred_check
        %p431 = pneg %p430
      $region54: #{tpu_custom_call.1} parent=5 // pred_check_branch
        %433 = sbr.rel (%p431) target = $region56
      $region55: #{tpu_custom_call.1} parent=5 // pred_region
        %s434 = ssub.s32 %s16, 2
        // Predicated region
        $region57: #{tpu_custom_call.1} parent=55 // pred_check
          %p435 = pneg %p148
        $region58: #{tpu_custom_call.1} parent=55 // pred_check_branch
          %437 = sbr.rel (%p435) target = $region60
        $region59: #{tpu_custom_call.1} parent=55 // pred_region
          %s438 = sand.u32 %s133, 1
          %s439 = scalar_lea.sflag [#allocation5], %s438
          %s440 = sand.u32 %s133, 1
          %s441 = smul.addr %s440, 8
          %s442 = scalar_lea.vmem [#allocation8], %s441
          %443 = dma.done %s439, 128
        $region60: #{tpu_custom_call.1} parent=55 // pred_fallthru
          _
      $region56: #{tpu_custom_call.1} parent=5 // pred_fallthru
        _
    $region6: #{tpu_custom_call.1} parent=1 // loop_footer
      %s20 = sadd.s32 1, %s16
    $region7: #{tpu_custom_call.1} parent=1 // loop_footer_branch
      %15 = sbr.rel target = $region3
    $region8: #{tpu_custom_call.1} parent=1 // loop_exit
      _
    %444 = vsyncpa [#allocation4], 1
    %s445 = scalar_lea.sflag [#allocation4], 1
    %446 = vsyncpa %s445, 1
    %447 = vsyncpa [#allocation7], 1
    %s448 = scalar_lea.sflag [#allocation7], 1
    %449 = vsyncpa %s448, 1
    %450 = vsyncpa [#allocation5], 1
    %s451 = scalar_lea.sflag [#allocation5], 1
    %452 = vsyncpa %s451, 1

</llo_original>
